<compile_context>
chip_gen: v5e
topology: v5e:2x2
jax: 0.10.0
libtpu: 0.0.40
codegen_flags: <defaults>
</compile_context>

<pallas_src>
import numpy as np
import jax
import jax.numpy as jnp
from jax.experimental import pallas as pl
from jax.experimental.pallas import tpu as pltpu

_LANES = 128
_TS_PAD_ROW_BYTES = _LANES * 4      # a (rows, k<128) f32 ts block lane-pads to 128 lanes in VMEM
_TARGET_LIVE_VMEM = 8 << 20         # double-buffered (ts + out) working-set target; v5e-safe
_VMEM_LIMIT_BYTES = 32 * 1024 * 1024


def _pick_block_rows(total_rows, out_row_bytes):
    """Fixed block row count for a pl.cdiv grid (Pallas masks the partial last block).

    Rows are a multiple of 8 (block-shape rule).  The count is capped so that
    (a) the double-buffered input+output working set stays near
        _TARGET_LIVE_VMEM (the lane-padded ts tile is counted at full 128-lane
        width, per the VMEM-accounting review note), and
    (b) the grid has at least 2 steps whenever total_rows >= 16, so the
        "parallel" grid axis can be split across v7x's two TensorCores.
    """
    if total_rows < 16:
        return total_rows                                   # single full-extent block
    per_row = 2 * (out_row_bytes + _TS_PAD_ROW_BYTES)       # x2: double buffering
    target = max(8, (_TARGET_LIVE_VMEM // per_row) // 8 * 8)
    half = max(8, (total_rows // 2) // 8 * 8)
    return min(target, half)


def _time_encode_packed_kernel(ts_ref, fsel_ref, prow_ref, out_ref):
    # ts_ref:   (R, K)    K consecutive timestamps per packed 128-lane output row
    # fsel_ref: (K, 128)  fsel[j, l] = freq_row[l] if lane l belongs to timestamp j else 0
    # prow_ref: (1, 128)  phase for cos lanes, phase - pi/2 for sin lanes
    # out_ref:  (R, 128)  packed (lane-dense) view of the row-major (S, 2*D) output
    ts = ts_ref[...]                                        # (R, K)
    m = ts[:, 0:1] * fsel_ref[0:1, :] + prow_ref[...]       # (R, 128) broadcasts
    for j in range(1, ts.shape[1]):                         # short static unroll; exact (+0 elsewhere)
        m = m + ts[:, j:j + 1] * fsel_ref[j:j + 1, :]
    out_ref[...] = jnp.cos(m)                               # one transcendental; sin = cos(x - pi/2)


def _time_encode_full_kernel(ts_ref, freq2_ref, prow2_ref, out_ref):
    # ts_ref: (R, 1); freq2_ref/prow2_ref: (1, 2D) concatenated [cos|sin] rows.
    # Lane-dense (unmasked full-lane stores) whenever 2D is a multiple of 128;
    # best-effort single-store path for awkward 2D.
    out_ref[...] = jnp.cos(ts_ref[...] * freq2_ref[...] + prow2_ref[...])


def time_encode(ts, basis_freq, phase):
    """Pallas TimeEncode.forward: ts (S,) -> (S, 2*D) = [cos | sin](ts*freq + phase)."""
    S = ts.shape[0]
    D = basis_freq.shape[0]
    two_d = 2 * D
    ts = ts.astype(jnp.float32)
    basis_freq = basis_freq.astype(jnp.float32)
    phase = phase.astype(jnp.float32)

    params = pltpu.CompilerParams(dimension_semantics=("parallel",),
                                  vmem_limit_bytes=_VMEM_LIMIT_BYTES)

    # Concatenated per-output-column constants encoding the [cos | sin] interleave:
    # sin realized as cos(x - pi/2) so there is exactly one transcendental per element.
    freq_cs = jnp.concatenate([basis_freq, basis_freq])                       # (2D,)
    phase_cs = jnp.concatenate([phase, phase - np.float32(np.pi / 2)])        # (2D,)

    if _LANES % two_d == 0:
        # ------------------ packed, lane-dense path (k timestamps / 128-lane row) ------------------
        k = _LANES // two_d
        s_pad = -(-S // k) * k                       # pad S up to a multiple of k (zeros; sliced off)
        ts_p = jnp.pad(ts, (0, s_pad - S)) if s_pad != S else ts
        total_rows = s_pad // k                      # = s_pad * 2D / 128
        block_rows = _pick_block_rows(total_rows, _LANES * 4)
        grid = (pl.cdiv(total_rows, block_rows),)

        freq_row = jnp.tile(freq_cs, k)                                       # (128,)
        phase_row = jnp.tile(phase_cs, k)[None, :]                            # (1, 128)
        owner = np.arange(_LANES) // two_d                                    # lane -> timestamp slot
        sel = jnp.asarray(owner[None, :] == np.arange(k)[:, None], jnp.float32)   # (K, 128) exact 0/1
        freq_sel = sel * freq_row[None, :]                                    # (K, 128)

        ts_view = ts_p.reshape(total_rows, k)                                 # free view

        out_packed = pl.pallas_call(
            _time_encode_packed_kernel,
            out_shape=jax.ShapeDtypeStruct((total_rows, _LANES), jnp.float32),
            grid_spec=pltpu.PrefetchScalarGridSpec(
                num_scalar_prefetch=0,
                grid=grid,
                in_specs=[
                    pl.BlockSpec((block_rows, k), lambda i: (i, 0)),
                    pl.BlockSpec((k, _LANES), lambda i: (0, 0)),
                    pl.BlockSpec((1, _LANES), lambda i: (0, 0)),
                ],
                out_specs=pl.BlockSpec((block_rows, _LANES), lambda i: (i, 0)),
            ),
            compiler_params=params,
        )(ts_view, freq_sel, phase_row)
        # Packed (s_pad*2D/128, 128) is byte-identical to row-major (s_pad, 2D).
        out = out_packed.reshape(s_pad, two_d)
        return out if s_pad == S else out[:S]

    # ------------------ full-width path (2D does not divide 128 lanes) ------------------
    block_rows = _pick_block_rows(S, two_d * 4)
    grid = (pl.cdiv(S, block_rows),)
    return pl.pallas_call(
        _time_encode_full_kernel,
        out_shape=jax.ShapeDtypeStruct((S, two_d), jnp.float32),
        grid_spec=pltpu.PrefetchScalarGridSpec(
            num_scalar_prefetch=0,
            grid=grid,
            in_specs=[
                pl.BlockSpec((block_rows, 1), lambda i: (i, 0)),
                pl.BlockSpec((1, two_d), lambda i: (0, 0)),
                pl.BlockSpec((1, two_d), lambda i: (0, 0)),
            ],
            out_specs=pl.BlockSpec((block_rows, two_d), lambda i: (i, 0)),
        ),
        compiler_params=params,
    )(ts.reshape(S, 1), freq_cs.reshape(1, two_d), phase_cs.reshape(1, two_d))


def time_encode_ref(ts, basis_freq, phase):
    """Pure-JAX reference mirroring the PyTorch forward."""
    m = ts.reshape(-1, 1).astype(jnp.float32) * basis_freq.reshape(1, -1) \
        + phase.reshape(1, -1)
    return jnp.concatenate([jnp.cos(m), jnp.sin(m)], axis=-1)


if __name__ == "__main__":
    # Module config (small): expand_dim = 32 -> time_dim = 16
    expand_dim = 32
    time_dim = expand_dim // 2

    # Deterministic parameter init (matches TimeEncode.__init__)
    basis_freq = jnp.asarray(1.0 / 10.0 ** np.linspace(0, 9, time_dim), dtype=jnp.float32)
    phase = jnp.zeros((time_dim,), dtype=jnp.float32)

    key = jax.random.PRNGKey(0)
    k1, k2, k3 = jax.random.split(key, 3)

    # Tolerance note: sin is computed as cos(x - pi/2); for |x| <= ~100 this adds
    # <= ~4e-6 absolute error on top of f32 range reduction, hence atol=2e-5.
    RTOL, ATOL = 1e-5, 2e-5

    # 1) Small, module-consistent shape (seq_len = 8): single-block packed grid.
    ts_small = jax.random.uniform(k1, (8,), dtype=jnp.float32) * 100.0
    out_small = jax.block_until_ready(time_encode(ts_small, basis_freq, phase))
    np.testing.assert_allclose(np.asarray(out_small),
                               np.asarray(time_encode_ref(ts_small, basis_freq, phase)),
                               rtol=RTOL, atol=ATOL)
    assert out_small.shape == (8, expand_dim)

    # 2) Larger, odd-length sequence: multi-step cdiv grid with a masked partial
    #    last block plus the S % k pad/slice path.
    ts_big = jax.random.uniform(k2, (30001,), dtype=jnp.float32) * 100.0
    out_big = jax.block_until_ready(time_encode(ts_big, basis_freq, phase))
    np.testing.assert_allclose(np.asarray(out_big),
                               np.asarray(time_encode_ref(ts_big, basis_freq, phase)),
                               rtol=RTOL, atol=ATOL)
    assert out_big.shape == (30001, expand_dim)

    # 3) Wide expand_dim (2*D a multiple of 128): lane-dense full-width path
    #    with a partial last block.
    wide_expand = 256
    wide_td = wide_expand // 2
    bf_w = jnp.asarray(1.0 / 10.0 ** np.linspace(0, 9, wide_td), dtype=jnp.float32)
    ph_w = jnp.zeros((wide_td,), dtype=jnp.float32)
    ts_w = jax.random.uniform(k3, (40,), dtype=jnp.float32) * 100.0
    out_w = jax.block_until_ready(time_encode(ts_w, bf_w, ph_w))
    np.testing.assert_allclose(np.asarray(out_w),
                               np.asarray(time_encode_ref(ts_w, bf_w, ph_w)),
                               rtol=RTOL, atol=ATOL)
    assert out_w.shape == (40, wide_expand)

    print("KERNEL_OK")
</pallas_src>

<mosaic_0001>
module attributes {stable_mosaic.version = 11 : i64} {
  func.func @_time_encode_packed_kernel(%arg0: i32, %arg1: memref<2x4xf32, #tpu.memory_space<vmem>>, %arg2: memref<4x128xf32, #tpu.memory_space<vmem>>, %arg3: memref<1x128xf32, #tpu.memory_space<vmem>>, %arg4: memref<2x128xf32, #tpu.memory_space<vmem>>) attributes {dimension_semantics = [#tpu.dimension_semantics<parallel>], iteration_bounds = array<i64: 1>, scalar_prefetch = 0 : i64, scratch_operands = 0 : i64, tpu.core_type = #tpu.core_type<tc>, window_params = [{transform_indices = @transform_0, window_bounds = array<i64: 2, 4>}, {pipeline_mode = #tpu.pipeline_mode<synchronous>, transform_indices = @transform_1, window_bounds = array<i64: 4, 128>}, {pipeline_mode = #tpu.pipeline_mode<synchronous>, transform_indices = @transform_2, window_bounds = array<i64: 1, 128>}, {transform_indices = @transform_3, window_bounds = array<i64: 2, 128>}]} {
    %c0 = arith.constant 0 : index
    %c0_0 = arith.constant 0 : index
    %0 = vector.load %arg1[%c0, %c0_0] : memref<2x4xf32, #tpu.memory_space<vmem>>, vector<2x4xf32>
    %1 = vector.extract_strided_slice %0 {offsets = [0, 0], sizes = [2, 1], strides = [1, 1]} : vector<2x4xf32> to vector<2x1xf32>
    %c0_1 = arith.constant 0 : index
    %c0_2 = arith.constant 0 : index
    %2 = vector.load %arg2[%c0_1, %c0_2] : memref<4x128xf32, #tpu.memory_space<vmem>>, vector<1x128xf32>
    %3 = vector.broadcast %1 : vector<2x1xf32> to vector<2x128xf32>
    %4 = vector.broadcast %2 : vector<1x128xf32> to vector<2x128xf32>
    %5 = arith.mulf %3, %4 : vector<2x128xf32>
    %c0_3 = arith.constant 0 : index
    %c0_4 = arith.constant 0 : index
    %6 = vector.load %arg3[%c0_3, %c0_4] : memref<1x128xf32, #tpu.memory_space<vmem>>, vector<1x128xf32>
    %7 = vector.broadcast %6 : vector<1x128xf32> to vector<2x128xf32>
    %8 = arith.addf %5, %7 : vector<2x128xf32>
    %9 = vector.extract_strided_slice %0 {offsets = [0, 1], sizes = [2, 1], strides = [1, 1]} : vector<2x4xf32> to vector<2x1xf32>
    %c1 = arith.constant 1 : index
    %c0_5 = arith.constant 0 : index
    %10 = vector.load %arg2[%c1, %c0_5] : memref<4x128xf32, #tpu.memory_space<vmem>>, vector<1x128xf32>
    %11 = vector.broadcast %9 : vector<2x1xf32> to vector<2x128xf32>
    %12 = vector.broadcast %10 : vector<1x128xf32> to vector<2x128xf32>
    %13 = arith.mulf %11, %12 : vector<2x128xf32>
    %14 = arith.addf %8, %13 : vector<2x128xf32>
    %15 = vector.extract_strided_slice %0 {offsets = [0, 2], sizes = [2, 1], strides = [1, 1]} : vector<2x4xf32> to vector<2x1xf32>
    %c2 = arith.constant 2 : index
    %c0_6 = arith.constant 0 : index
    %16 = vector.load %arg2[%c2, %c0_6] : memref<4x128xf32, #tpu.memory_space<vmem>>, vector<1x128xf32>
    %17 = vector.broadcast %15 : vector<2x1xf32> to vector<2x128xf32>
    %18 = vector.broadcast %16 : vector<1x128xf32> to vector<2x128xf32>
    %19 = arith.mulf %17, %18 : vector<2x128xf32>
    %20 = arith.addf %14, %19 : vector<2x128xf32>
    %21 = vector.extract_strided_slice %0 {offsets = [0, 3], sizes = [2, 1], strides = [1, 1]} : vector<2x4xf32> to vector<2x1xf32>
    %c3 = arith.constant 3 : index
    %c0_7 = arith.constant 0 : index
    %22 = vector.load %arg2[%c3, %c0_7] : memref<4x128xf32, #tpu.memory_space<vmem>>, vector<1x128xf32>
    %23 = vector.broadcast %21 : vector<2x1xf32> to vector<2x128xf32>
    %24 = vector.broadcast %22 : vector<1x128xf32> to vector<2x128xf32>
    %25 = arith.mulf %23, %24 : vector<2x128xf32>
    %26 = arith.addf %20, %25 : vector<2x128xf32>
    %27 = math.cos %26 : vector<2x128xf32>
    %c0_8 = arith.constant 0 : index
    %c0_9 = arith.constant 0 : index
    %28 = vector.load %arg4[%c0_8, %c0_9] : memref<2x128xf32, #tpu.memory_space<vmem>>, vector<2x128xf32>
    tpu.vector_store %arg4[%c0_8, %c0_9], %27 {strides = array<i32>} : memref<2x128xf32, #tpu.memory_space<vmem>>, vector<2x128xf32>,
    return
  }
  func.func @transform_0(%arg0: i32) -> (i32, i32) {
    %c0_i32 = arith.constant 0 : i32
    %c0_i32_0 = arith.constant 0 : i32
    return %arg0, %c0_i32 : i32, i32
  }
  func.func @transform_1(%arg0: i32) -> (i32, i32) {
    %c0_i32 = arith.constant 0 : i32
    %c0_i32_0 = arith.constant 0 : i32
    %c0_i32_1 = arith.constant 0 : i32
    return %c0_i32, %c0_i32_0 : i32, i32
  }
  func.func @transform_2(%arg0: i32) -> (i32, i32) {
    %c0_i32 = arith.constant 0 : i32
    %c0_i32_0 = arith.constant 0 : i32
    %c0_i32_1 = arith.constant 0 : i32
    return %c0_i32, %c0_i32_0 : i32, i32
  }
  func.func @transform_3(%arg0: i32) -> (i32, i32) {
    %c0_i32 = arith.constant 0 : i32
    %c0_i32_0 = arith.constant 0 : i32
    return %arg0, %c0_i32 : i32, i32
  }
}

</mosaic_0001>

<llo_original>
// kernel: tpu_custom_call.1
$region0: #{tpu_custom_call.1}
  #allocation0 [shape = 'u32[]', space=smem, size = 0x4, offset = 0x4, fixed_abs, tag = 'smem constant byte address 0x4 - core index']
  #allocation1 [shape = 'u32[72,128]{1,0:T(1,128)}', space=vmem, size = 0x9000, scoped, tag = 'internal scratch']
  %s0 = inlined_call_operand.hbm [shape: f32[2,4], index: 0, kind: input, shape index: {}]
  %s1 = inlined_call_operand.hbm [shape: f32[4,128], index: 1, kind: input, shape index: {}]
  %s2 = inlined_call_operand.vmem [shape: f32[1,128], index: 2, kind: input, shape index: {}]
  %s3 = inlined_call_operand.hbm [shape: f32[2,128], index: 3, kind: output, shape index: {}]
  %s4 = sld [smem:[#allocation0]]
  $region30: #{tpu_custom_call.1} parent=0
    _
  %s6 = ssub.s32 1, %s4
  %s7 = scalar_select 0, %s6, %s4
  $region1: #{tpu_custom_call.1} parent=0
    #allocation2 [shape = 'u8[1024]{0}', space=vmem, size = 0x400, scoped, tag = 'input window, operand 0, single buffered']
    #allocation3 [shape = 's32[1]{0}', space=sflag, size = 0x4, scoped, tag = 'scoped memory for tpu_custom_call.1']
    #allocation4 [shape = 's32[1]{0}', space=sflag, size = 0x4, scoped, tag = 'scoped memory for tpu_custom_call.1']
    #allocation5 [shape = 'u8[2048]{0}', space=vmem, size = 0x800, scoped, tag = 'input window, operand 1, single buffered']
    #allocation6 [shape = 's32[1]{0}', space=sflag, size = 0x4, scoped, tag = 'scoped memory for tpu_custom_call.1']
    #allocation7 [shape = 'u8[1024]{0}', space=vmem, size = 0x400, scoped, tag = 'output window, operand 0, single buffered']
    %8 = vsyncpa [#allocation3], 0
    %9 = vsyncpa [#allocation6], 0
    %10 = vsyncpa [#allocation4], 0
    // Predicated region
    $region2: #{tpu_custom_call.1} parent=1 // pred_check
      _
    $region3: #{tpu_custom_call.1} parent=1 // pred_check_branch
      %12 = sbr.rel (0) target = $region5
    $region4: #{tpu_custom_call.1} parent=1 // pred_region
      %14 = vsyncadd [#allocation3], 0
      %s16 = sshll.u32 %s0, 4
      %s17 = int_to_ptr.hbm [resolvable:$true] %s16
      %s18 = sshll.u32 [#allocation2], 4
      %s19 = int_to_ptr.vmem [resolvable:$true] %s18
      %21 = dma.hbm_to_vmem [thread:$0]  %s17, 32, %s19, [#allocation3]
    $region5: #{tpu_custom_call.1} parent=1 // pred_fallthru
      _
    // Predicated region
    $region6: #{tpu_custom_call.1} parent=1 // pred_check
      _
    $region7: #{tpu_custom_call.1} parent=1 // pred_check_branch
      %23 = sbr.rel (0) target = $region9
    $region8: #{tpu_custom_call.1} parent=1 // pred_region
      %25 = vsyncadd [#allocation6], 0
      %s27 = sshll.u32 %s1, 4
      %s28 = int_to_ptr.hbm [resolvable:$true] %s27
      %s29 = sshll.u32 [#allocation5], 4
      %s30 = int_to_ptr.vmem [resolvable:$true] %s29
      %32 = dma.hbm_to_vmem [thread:$0]  %s28, 64, %s30, [#allocation6]
    $region9: #{tpu_custom_call.1} parent=1 // pred_fallthru
      _
    // Predicated region
    $region10: #{tpu_custom_call.1} parent=1 // pred_check
      _
    $region11: #{tpu_custom_call.1} parent=1 // pred_check_branch
      %34 = sbr.rel (0) target = $region13
    $region12: #{tpu_custom_call.1} parent=1 // pred_region
      _
    $region13: #{tpu_custom_call.1} parent=1 // pred_fallthru
      _
    // Predicated region
    $region14: #{tpu_custom_call.1} parent=1 // pred_check
      _
    $region15: #{tpu_custom_call.1} parent=1 // pred_check_branch
      %36 = sbr.rel (0) target = $region17
    $region16: #{tpu_custom_call.1} parent=1 // pred_region
      %38 = dma.done [#allocation3], 32
    $region17: #{tpu_custom_call.1} parent=1 // pred_fallthru
      _
    // Predicated region
    $region18: #{tpu_custom_call.1} parent=1 // pred_check
      _
    $region19: #{tpu_custom_call.1} parent=1 // pred_check_branch
      %40 = sbr.rel (0) target = $region21
    $region20: #{tpu_custom_call.1} parent=1 // pred_region
      %42 = dma.done [#allocation6], 64
    $region21: #{tpu_custom_call.1} parent=1 // pred_fallthru
      _
    %v43 = vld [vmem:[#allocation2] sm:$0x3]
    %v44 = vld [vmem:[#allocation5] sm:$0x1]
    %46 = vset.pattern.permute.xlu0 0
    %47 = vperm.xlu0 %46, %v43
    %v48 = vpop.permute.xlu0 %47
    %v50 = vperm.slane %v44, 0
    %v51 = vmul.f32 %v48, %v50
    %v52 = vld [vmem:[%s2] sm:$0x1]
    %v54 = vperm.slane %v52, 0
    %v56 = vadd.f32 %v51, %v54
    %v57 = vld [vmem:[#allocation5 + $0x1] sm:$0x1]
    %58 = vset.pattern.permute.xlu0 1
    %59 = vperm.xlu0 %58, %v43
    %v60 = vpop.permute.xlu0 %59
    %v62 = vperm.slane %v57, 0
    %v63 = vmul.f32 %v60, %v62
    %v64 = vadd.f32 %v56, %v63
    %v65 = vld [vmem:[#allocation5 + $0x2] sm:$0x1]
    %66 = vset.pattern.permute.xlu0 2
    %67 = vperm.xlu0 %66, %v43
    %v68 = vpop.permute.xlu0 %67
    %v70 = vperm.slane %v65, 0
    %v71 = vmul.f32 %v68, %v70
    %v72 = vadd.f32 %v64, %v71
    %v73 = vld [vmem:[#allocation5 + $0x3] sm:$0x1]
    %74 = vset.pattern.permute.xlu0 3
    %75 = vperm.xlu0 %74, %v43
    %v76 = vpop.permute.xlu0 %75
    %v78 = vperm.slane %v73, 0
    %v79 = vmul.f32 %v76, %v78
    %v80 = vadd.f32 %v72, %v79
    %v81 = vand.u32 2147483647, %v80
    %vm82 = vcmp.le.f32.partialorder %v81, 0.7853982
    %vm83 = vcmp.lt.s32.totalorder %v80, 0
    %v84 = vand.u32 %v80, 2139095040
    %v85 = vshrl.u32 %v84, 23
    %v86 = vsub.s32 %v85, 127
    %v87 = vand.u32 2147483647, %v80
    %v88 = vand.u32 %v87, 8388607
    %v89 = vor.u32 %v88, 8388608
    %v90 = vsub.s32 0, %v89
    %v91 = vadd.s32 %v86, 1
    %vm92 = vcmp.gt.s32.totalorder %v91, 0
    %v93 = vsel %vm92, %v91, 0
    %v94 = vshrl.u32 %v93, 5
    %v95 = vand.u32 %v93, 31
    %v96 = vsub.s32 32, %v95
    %v97 = vshrl.u32 683565275, %v96
    %v98 = vshll.u32 683565275, %v95
    %v99 = vshrl.u32 2475754826, %v96
    %v100 = vor.u32 %v98, %v99
    %v101 = vshll.u32 2475754826, %v95
    %v102 = vshrl.u32 2131351028, %v96
    %v103 = vor.u32 %v101, %v102
    %v104 = vshll.u32 2131351028, %v95
    %v105 = vshrl.u32 2102212464, %v96
    %v106 = vor.u32 %v104, %v105
    %v107 = vshll.u32 2102212464, %v95
    %v108 = vshrl.u32 920167782, %v96
    %v109 = vor.u32 %v107, %v108
    %v110 = vshll.u32 920167782, %v95
    %v111 = vshrl.u32 1326507024, %v96
    %v112 = vor.u32 %v110, %v111
    %vm113 = vcmp.lt.s32.totalorder %v94, 1
    %vm114 = vcmp.lt.s32.totalorder %v94, 2
    %vm115 = vcmp.lt.s32.totalorder %v94, 3
    %vm116 = vcmp.lt.s32.totalorder %v94, 4
    %v117 = vsel %vm113, %v97, %v100
    %v118 = vsel %vm116, %v106, 2102212464
    %v119 = vsel %vm115, %v103, %v118
    %v120 = vsel %vm114, %v117, %v119
    %v121 = vsel %vm113, %v100, %v103
    %v122 = vsel %vm116, %v109, 920167782
    %v123 = vsel %vm115, %v106, %v122
    %v124 = vsel %vm114, %v121, %v123
    %v125 = vsel %vm113, %v103, %v106
    %v126 = vsel %vm116, %v112, 1326507024
    %v127 = vsel %vm115, %v109, %v126
    %v128 = vsel %vm114, %v125, %v127
    %v129 = vshll.u32 %v89, 8
    %v130 = vand.u32 %v129, 65535
    %v131 = vshrl.u32 %v129, 16
    %v132 = vand.u32 %v128, 65535
    %v133 = vshrl.u32 %v128, 16
    %v134 = vmul.u32 %v130, %v132
    %v135 = vmul.u32 %v130, %v133
    %v136 = vmul.u32 %v131, %v132
    %v137 = vmul.u32 %v131, %v133
    %v138 = vshll.u32 %v135, 16
    %v139 = vshrl.u32 %v135, 16
    %v140 = vshll.u32 %v136, 16
    %v141 = vshrl.u32 %v136, 16
    %vm142 = vc.u32 %v134, %v138
    %v143 = vsel %vm142, 1, 0
    %v144 = vadd.s32 %v134, %v138
    %v145 = vadd.s32 %v137, %v143
    %vm146 = vc.u32 %v144, %v140
    %v147 = vsel %vm146, 1, 0
    %v148 = vadd.s32 %v144, %v140
    %v149 = vadd.s32 %v145, %v147
    %v150 = vadd.s32 %v149, %v139
    %v151 = vadd.s32 %v150, %v141
    %v152 = vand.u32 %v129, 65535
    %v153 = vshrl.u32 %v129, 16
    %v154 = vand.u32 %v124, 65535
    %v155 = vshrl.u32 %v124, 16
    %v156 = vmul.u32 %v152, %v154
    %v157 = vmul.u32 %v152, %v155
    %v158 = vmul.u32 %v153, %v154
    %v159 = vmul.u32 %v153, %v155
    %v160 = vshll.u32 %v157, 16
    %v161 = vshrl.u32 %v157, 16
    %v162 = vshll.u32 %v158, 16
    %v163 = vshrl.u32 %v158, 16
    %vm164 = vc.u32 %v156, %v160
    %v165 = vsel %vm164, 1, 0
    %v166 = vadd.s32 %v156, %v160
    %v167 = vadd.s32 %v159, %v165
    %vm168 = vc.u32 %v166, %v162
    %v169 = vsel %vm168, 1, 0
    %v170 = vadd.s32 %v166, %v162
    %v171 = vadd.s32 %v167, %v169
    %v172 = vadd.s32 %v171, %v161
    %v173 = vadd.s32 %v172, %v163
    %v174 = vmul.u32 %v129, %v120
    %v175 = vadd.s32 %v151, %v170
    %vm176 = vc.u32 %v151, %v170
    %v177 = vadd.s32 %v173, 1
    %v178 = vsel %vm176, %v177, %v173
    %v179 = vadd.s32 %v174, %v178
    %v180 = vadd.s32 %v179, 536870912
    %v181 = vshrl.u32 %v180, 30
    %v182 = vshll.u32 %v181, 30
    %v183 = vsub.s32 %v179, %v182
    %vm184 = vcmp.lt.s32.totalorder %v183, 0
    %v185 = vsub.s32 0, %v183
    %v186 = vsel %vm184, %v185, %v183
    %v187 = vclz %v186
    %v188 = vsub.s32 %v187, 2
    %vm189 = vcmp.gt.s32.totalorder 0, %v188
    %v190 = vsel %vm189, 0, %v188
    %v191 = vsub.s32 32, %v190
    %v192 = vshll.u32 %v183, %v190
    %v193 = vshrl.u32 %v175, %v191
    %v194 = vor.u32 %v192, %v193
    %v195 = vsub.s32 4294967266, %v190
    %v196 = vadd.s32 %v195, 127
    %v197 = vshll.u32 %v196, 23
    %v198 = vor.u32 4788187, %v197
    %v199 = vand.u32 2147483647, %v198
    %v201 = vcvt.s32.f32 %v194
    %v202 = vmul.f32 %v201, %v199
    %v203 = vxor.u32 %v202, 2147483648
    %v204 = vsel %vm83, %v203, %v202
    %v205 = vsub.s32 4, %v181
    %v206 = vsel %vm83, %v205, %v181
    %v207 = vsel %vm82, %v80, %v204
    %v208 = vsel %vm82, 0, %v206
    %v209 = vmul.f32 %v207, %v207
    %v210 = vmul.f32 %v209, -0.001358992
    %v211 = vadd.f32 %v210, 0.041655596
    %v212 = vmul.f32 %v209, %v211
    %v213 = vadd.f32 %v212, -0.4999988
    %v214 = vmul.f32 %v209, %v213
    %v215 = vadd.f32 1.0, %v214
    %v216 = vmul.f32 %v207, %v207
    %v217 = vmul.f32 %v216, -0.00019511016
    %v218 = vadd.f32 %v217, 0.008332121
    %v219 = vmul.f32 %v216, %v218
    %v220 = vadd.f32 %v219, -0.16666654
    %v221 = vmul.f32 %v216, %v220
    %v222 = vadd.f32 %v221, 1.0
    %v223 = vmul.f32 %v222, %v207
    %vm224 = vweird.f32 %v80
    %v225 = vand.u32 %v208, 3
    %vm226 = vcmp.lt.s32.totalorder %v225, 2
    %vm227 = vcmp.eq.s32.totalorder %v225, 0
    %v228 = vxor.u32 %v223, 2147483648
    %v229 = vsel %vm227, %v215, %v228
    %vm230 = vcmp.eq.s32.totalorder %v225, 2
    %v231 = vxor.u32 %v215, 2147483648
    %v232 = vsel %vm230, %v231, %v223
    %v233 = vsel %vm226, %v229, %v232
    %v234 = vsel %vm224, nan, %v233
    %235 = vst [vmem:[#allocation7] sm:$0x3] %v234
    // Predicated region
    $region22: #{tpu_custom_call.1} parent=1 // pred_check
      _
    $region23: #{tpu_custom_call.1} parent=1 // pred_check_branch
      %237 = sbr.rel (0) target = $region25
    $region24: #{tpu_custom_call.1} parent=1 // pred_region
      %239 = vsyncadd [#allocation4], 0
      %s241 = sshll.u32 [#allocation7], 4
      %s242 = int_to_ptr.vmem [resolvable:$true] %s241
      %s243 = sshll.u32 %s3, 4
      %s244 = int_to_ptr.hbm [resolvable:$true] %s243
      %246 = dma.vmem_to_hbm [thread:$0]  %s242, 32, %s244, [#allocation4]
    $region25: #{tpu_custom_call.1} parent=1 // pred_fallthru
      _
    // Predicated region
    $region26: #{tpu_custom_call.1} parent=1 // pred_check
      _
    $region27: #{tpu_custom_call.1} parent=1 // pred_check_branch
      %248 = sbr.rel (0) target = $region29
    $region28: #{tpu_custom_call.1} parent=1 // pred_region
      %250 = dma.done [#allocation4], 32
    $region29: #{tpu_custom_call.1} parent=1 // pred_fallthru
      _
    %251 = vsyncpa [#allocation3], 1
    %252 = vsyncpa [#allocation6], 1
    %253 = vsyncpa [#allocation4], 1

</llo_original>
